<compile_context>
chip_gen: v6e
topology: v6e:2x2x1
jax: 0.10.0
libtpu: 0.0.40
codegen_flags: <defaults>
</compile_context>

<pallas_src>
import numpy as np
import jax
import jax.numpy as jnp
from jax.experimental import pallas as pl
from jax.experimental.pallas import tpu as pltpu


# ---------------------------------------------------------------------------
# Generation-aware VMEM budgets
# ---------------------------------------------------------------------------
def _vmem_capacity_bytes():
    try:
        info = pltpu.get_tpu_info()
        cap = int(getattr(info, "vmem_capacity_bytes", 0) or 0)
        if cap > 0:
            return cap
    except Exception:
        pass
    # Conservative default = v7x (64 MiB physical VMEM).
    return 64 * 1024 * 1024


_VMEM_CAP = _vmem_capacity_bytes()
if _VMEM_CAP >= 100 * 1024 * 1024:
    # v5e / v6e: 128 MiB physical VMEM -> bigger tiles, fewer grid steps.
    _TILE_BYTES = 16 * 1024 * 1024     # per-buffer budget (outputs + targets)
    _VMEM_LIMIT = 56 * 1024 * 1024
else:
    # v7x: 64 MiB physical VMEM -> stay conservative.
    _TILE_BYTES = 8 * 1024 * 1024
    _VMEM_LIMIT = 44 * 1024 * 1024


def _round_up(x, m):
    return ((x + m - 1) // m) * m


def _choose_tm(n, c):
    """Rows per tile for the 2-D accuracy kernel.

    Byte-budgeted (no row cap): outputs row = C*4 B, plus the lane-padded
    (TM, 1) int32 target block which occupies 128 lanes -> 512 B/row of VMEM.
    Double-buffering is covered by the per-buffer budget vs. vmem limit."""
    bytes_per_row = c * 4 + 512
    tm = max(8, (_TILE_BYTES // bytes_per_row) // 8 * 8)
    return min(tm, _round_up(n, 8))


# ---------------------------------------------------------------------------
# Pallas kernels
# ---------------------------------------------------------------------------
def _make_acc_2d_kernel(n_rows, tm, c):
    """Replicates: _, preds = torch.max(outputs, 1); count (preds == targets).

    Writes a per-tile partial count; rows past n_rows (ragged last block)
    are masked out, so no padded copy of `outputs` is needed."""
    def kernel(out_ref, tgt_ref, partial_ref):
        out = out_ref[...]                                        # (TM, C) f32
        row_max = jnp.max(out, axis=1, keepdims=True)             # (TM, 1)
        col = jax.lax.broadcasted_iota(jnp.int32, out.shape, 1)   # (TM, C)
        # torch.max returns the FIRST index attaining the max -> min index.
        # TODO(synk): NaN rows diverge from torch.max semantics (sentinel C).
        preds = jnp.min(jnp.where(out == row_max, col, c), axis=1,
                        keepdims=True)                            # (TM, 1) i32
        tgt = tgt_ref[...]                                        # (TM, 1) i32
        row = (pl.program_id(0) * tm
               + jax.lax.broadcasted_iota(jnp.int32, (tm, 1), 0)) # (TM, 1)
        valid = row < n_rows
        match = jnp.logical_and(valid, preds == tgt)
        partial_ref[0, 0] = jnp.sum(match.astype(jnp.int32))
    return kernel


def _make_acc_1d_kernel(rows_total, tr):
    """Replicates: predictions = outputs > 0.0 for 1-D logits.

    Operates on a sublane/lane-dense (rows, 128) packing; padded lanes carry
    target = -1 (never matches a {0,1} prediction); ragged rows are masked."""
    def kernel(out_ref, tgt_ref, partial_ref):
        out = out_ref[...]                                        # (TR, 128)
        tgt = tgt_ref[...]                                        # (TR, 128)
        preds = (out > 0.0).astype(jnp.int32)
        row = (pl.program_id(0) * tr
               + jax.lax.broadcasted_iota(jnp.int32, (tr, 128), 0))
        valid = row < rows_total
        match = jnp.logical_and(valid, preds == tgt)
        partial_ref[0, 0] = jnp.sum(match.astype(jnp.int32))
    return kernel


def _sum_kernel(loss_ref, sum_ref):
    """Sum of lane/sublane-dense (R, 128) f32 block (mean finished on host)."""
    sum_ref[0, 0] = jnp.sum(loss_ref[...])


# ---------------------------------------------------------------------------
# jitted wrappers (device-side accumulation; no per-call host sync)
# ---------------------------------------------------------------------------
@jax.jit
def _acc_2d_update(correct_so_far, outputs, targets):
    n, c = outputs.shape
    tm = _choose_tm(n, c)
    num_tiles = pl.cdiv(n, tm)
    tgt2 = targets.reshape(n, 1).astype(jnp.int32)

    partials = pl.pallas_call(
        _make_acc_2d_kernel(n, tm, c),
        out_shape=jax.ShapeDtypeStruct((num_tiles, 1), jnp.int32),
        grid=(num_tiles,),
        in_specs=[pl.BlockSpec((tm, c), lambda i: (i, 0)),
                  pl.BlockSpec((tm, 1), lambda i: (i, 0))],
        out_specs=pl.BlockSpec((1, 1), lambda i: (i, 0),
                               memory_space=pltpu.MemorySpace.SMEM),
        compiler_params=pltpu.CompilerParams(
            dimension_semantics=("parallel",),
            vmem_limit_bytes=_VMEM_LIMIT),
    )(outputs, tgt2)
    return correct_so_far + jnp.sum(partials)


@jax.jit
def _acc_1d_update(correct_so_far, outputs, targets):
    n = outputs.shape[0]
    n_pad = _round_up(n, 128)
    # 1-D vectors are tiny; padding them (not the (N, C) outputs) is cheap.
    out_p = jnp.pad(outputs, (0, n_pad - n)).reshape(n_pad // 128, 128)
    tgt_p = jnp.pad(targets.astype(jnp.int32), (0, n_pad - n),
                    constant_values=-1).reshape(n_pad // 128, 128)
    rows = n_pad // 128
    # f32 + i32 lane-dense rows = 1024 B/row of VMEM per buffer.
    tr = max(8, (_TILE_BYTES // 1024) // 8 * 8)
    tr = min(tr, _round_up(rows, 8))
    num_tiles = pl.cdiv(rows, tr)

    partials = pl.pallas_call(
        _make_acc_1d_kernel(rows, tr),
        out_shape=jax.ShapeDtypeStruct((num_tiles, 1), jnp.int32),
        grid=(num_tiles,),
        in_specs=[pl.BlockSpec((tr, 128), lambda i: (i, 0)),
                  pl.BlockSpec((tr, 128), lambda i: (i, 0))],
        out_specs=pl.BlockSpec((1, 1), lambda i: (i, 0),
                               memory_space=pltpu.MemorySpace.SMEM),
        compiler_params=pltpu.CompilerParams(
            dimension_semantics=("parallel",),
            vmem_limit_bytes=_VMEM_LIMIT),
    )(out_p, tgt_p)
    return correct_so_far + jnp.sum(partials)


@jax.jit
def _loss_sum(dense_losses):
    return pl.pallas_call(
        _sum_kernel,
        out_shape=jax.ShapeDtypeStruct((1, 1), jnp.float32),
        in_specs=[pl.BlockSpec(memory_space=pltpu.MemorySpace.VMEM)],
        out_specs=pl.BlockSpec(memory_space=pltpu.MemorySpace.SMEM),
    )(dense_losses)[0, 0]


def pallas_update_acc_count(correct_so_far, outputs, targets):
    """Returns a device-side int32 scalar: correct_so_far + new correct count."""
    outputs = jnp.asarray(outputs, jnp.float32)
    targets = jnp.asarray(targets, jnp.int32)
    if outputs.ndim == 1:
        return _acc_1d_update(correct_so_far, outputs, targets)
    return _acc_2d_update(correct_so_far, outputs, targets)


def pallas_mean_loss(losses):
    """Mean of recorded losses (only called per-epoch in get_desc)."""
    losses = np.asarray(losses, dtype=np.float32).reshape(-1)
    num = losses.shape[0]
    if num == 0:                 # np.mean([]) is nan (with a warning)
        return float('nan')
    # Pack lane/sublane dense; power-of-two padded length bounds recompiles.
    l_pad = max(1024, int(pl.next_power_of_2(num)))
    padded = np.zeros((l_pad,), np.float32)
    padded[:num] = losses
    dense = jnp.asarray(padded).reshape(l_pad // 128, 128)
    total = _loss_sum(dense)
    return float(jax.device_get(total)) / num


# ---------------------------------------------------------------------------
# LossEngine mirror (API-compatible glue around the kernels)
# ---------------------------------------------------------------------------
class LossEngine:
    # TODO(synk): forward() / get_features() are abstract in the reference
    # module (no concrete compute to translate); subclasses would supply them.
    def __init__(self, name, accuracy):
        self.name = name
        self.losses_items = []
        self.last_latent = None
        self._track_acc = bool(accuracy)
        self._correct_dev = jnp.zeros((), jnp.int32)   # device-side accumulator
        self._total = 0                                # statically known (shape)

    @property
    def acc_meta(self):
        if not self._track_acc:
            return None
        # Single host sync point (used by get_desc / tests), not per batch.
        return (int(jax.device_get(self._correct_dev)), self._total)

    def update_acc(self, outputs, targets):
        # Async device-side accumulation; no blocking readback here.
        self._correct_dev = pallas_update_acc_count(
            self._correct_dev, outputs, targets)
        self._total += int(targets.shape[0])

    def get_desc(self):
        avg_loss = pallas_mean_loss(self.losses_items)
        desc = self.name + '_loss=%.3f' % avg_loss
        if self._track_acc:
            correct, total = self.acc_meta
            desc += ' ' + self.name + '_acc=%.2f%%' % (100.0 * correct / total)
        return desc

    def clear_epoch(self):
        self.losses_items = []
        if self._track_acc:
            self._correct_dev = jnp.zeros((), jnp.int32)
            self._total = 0

    @property
    def latent(self):
        return self.last_latent

    def record_latent(self, x_latent):
        self.last_latent = np.asarray(x_latent)


# ---------------------------------------------------------------------------
# Demo / self-check
# ---------------------------------------------------------------------------
if __name__ == "__main__":
    key = jax.random.PRNGKey(0)
    k_out, k_tgt, k_loss, k_bin, k_btgt = jax.random.split(key, 5)

    N, C = 8, 32   # small batch / class count
    outputs_2d = jax.random.normal(k_out, (N, C), dtype=jnp.float32)
    targets_2d = jax.random.randint(k_tgt, (N,), 0, C, dtype=jnp.int32)
    losses = jax.random.uniform(k_loss, (8,), dtype=jnp.float32)

    outputs_1d = jax.random.normal(k_bin, (N,), dtype=jnp.float32)
    targets_1d = jax.random.randint(k_btgt, (N,), 0, 2, dtype=jnp.int32)

    engine = LossEngine("demo", accuracy=True)
    engine.losses_items = list(np.asarray(losses))
    engine.update_acc(outputs_2d, targets_2d)   # 2-D (argmax) path
    engine.update_acc(outputs_1d, targets_1d)   # 1-D (threshold) path
    engine.record_latent(outputs_2d)
    jax.block_until_ready(engine._correct_dev)  # block on kernel results
    desc = engine.get_desc()

    # --- reference check against numpy (same semantics as the torch helpers) ---
    ref_preds_2d = np.argmax(np.asarray(outputs_2d), axis=1)
    ref_correct = int(np.sum(ref_preds_2d == np.asarray(targets_2d)))
    ref_preds_1d = np.asarray(outputs_1d) > 0.0
    ref_correct += int(np.sum(ref_preds_1d.astype(np.int32) == np.asarray(targets_1d)))
    ref_total = 2 * N
    ref_mean = float(np.mean(np.asarray(losses)))

    got_mean = pallas_mean_loss(losses)
    assert engine.acc_meta == (ref_correct, ref_total), (engine.acc_meta, ref_correct, ref_total)
    assert abs(got_mean - ref_mean) < 1e-5, (got_mean, ref_mean)
    assert engine.latent.shape == (N, C)
    assert isinstance(desc, str) and desc.startswith("demo_loss=")

    print("KERNEL_OK")
</pallas_src>

<mosaic_0001>
module attributes {stable_mosaic.version = 11 : i64} {
  func.func @kernel(%arg0: i32, %arg1: memref<8x32xf32, #tpu.memory_space<vmem>>, %arg2: memref<8x1xi32, #tpu.memory_space<vmem>>, %arg3: memref<1x1xi32, #tpu.memory_space<smem>>) attributes {dimension_semantics = [#tpu.dimension_semantics<parallel>], iteration_bounds = array<i64: 1>, scalar_prefetch = 0 : i64, scratch_operands = 0 : i64, tpu.core_type = #tpu.core_type<tc>, window_params = [{transform_indices = @transform_0, window_bounds = array<i64: 8, 32>}, {transform_indices = @transform_1, window_bounds = array<i64: 8, 1>}, {transform_indices = @transform_2, window_bounds = array<i64: 1, 1>}]} {
    %c0 = arith.constant 0 : index
    %c0_0 = arith.constant 0 : index
    %0 = vector.load %arg1[%c0, %c0_0] : memref<8x32xf32, #tpu.memory_space<vmem>>, vector<8x32xf32>
    %cst = arith.constant dense<0xFF800000> : vector<8xf32>
    %1 = vector.multi_reduction <maximumf>, %0, %cst [1] : vector<8x32xf32> to vector<8xf32>
    %2 = vector.shape_cast %1 : vector<8xf32> to vector<8x1xf32>
    %3 = tpu.iota {dimensions = array<i32: 1>} : vector<8x32xi32>
    %4 = vector.broadcast %2 : vector<8x1xf32> to vector<8x32xf32>
    %5 = arith.cmpf oeq, %0, %4 : vector<8x32xf32>
    %c32_i32 = arith.constant 32 : i32
    %6 = vector.broadcast %c32_i32 : i32 to vector<8x32xi32>
    %7 = arith.select %5, %3, %6 : vector<8x32xi1>, vector<8x32xi32>
    %cst_1 = arith.constant dense<2147483647> : vector<8xi32>
    %8 = vector.multi_reduction <minsi>, %7, %cst_1 [1] : vector<8x32xi32> to vector<8xi32>
    %9 = vector.shape_cast %8 : vector<8xi32> to vector<8x1xi32>
    %c0_2 = arith.constant 0 : index
    %c0_3 = arith.constant 0 : index
    %10 = vector.load %arg2[%c0_2, %c0_3] : memref<8x1xi32, #tpu.memory_space<vmem>>, vector<8x1xi32>
    %c8_i32 = arith.constant 8 : i32
    %11 = arith.muli %arg0, %c8_i32 : i32
    %12 = tpu.iota {dimensions = array<i32: 0>} : vector<8x1xi32>
    %13 = vector.broadcast %11 : i32 to vector<8x1xi32>
    %14 = arith.addi %13, %12 : vector<8x1xi32>
    %c8_i32_4 = arith.constant 8 : i32
    %15 = vector.broadcast %c8_i32_4 : i32 to vector<8x1xi32>
    %16 = arith.cmpi slt, %14, %15 : vector<8x1xi32>
    %17 = arith.cmpi eq, %9, %10 : vector<8x1xi32>
    %18 = arith.andi %16, %17 : vector<8x1xi1>
    %19 = arith.extui %18 : vector<8x1xi1> to vector<8x1xi32>
    %20 = vector.shape_cast %19 : vector<8x1xi32> to vector<1x8x1xi32>
    %cst_5 = arith.constant dense<0> : vector<1xi32>
    %21 = vector.multi_reduction <add>, %20, %cst_5 [1, 2] : vector<1x8x1xi32> to vector<1xi32>
    %22 = vector.shape_cast %21 : vector<1xi32> to vector<1x1x1xi32>
    %23 = vector.extract %22[0, 0, 0] : i32 from vector<1x1x1xi32>
    %c0_6 = arith.constant 0 : index
    %c0_7 = arith.constant 0 : index
    %24 = memref.load %arg3[%c0_6, %c0_7] : memref<1x1xi32, #tpu.memory_space<smem>>
    memref.store %23, %arg3[%c0_6, %c0_7] : memref<1x1xi32, #tpu.memory_space<smem>>
    return
  }
  func.func @transform_0(%arg0: i32) -> (i32, i32) {
    %c0_i32 = arith.constant 0 : i32
    %c0_i32_0 = arith.constant 0 : i32
    return %arg0, %c0_i32 : i32, i32
  }
  func.func @transform_1(%arg0: i32) -> (i32, i32) {
    %c0_i32 = arith.constant 0 : i32
    %c0_i32_0 = arith.constant 0 : i32
    return %arg0, %c0_i32 : i32, i32
  }
  func.func @transform_2(%arg0: i32) -> (i32, i32) {
    %c0_i32 = arith.constant 0 : i32
    %c0_i32_0 = arith.constant 0 : i32
    return %arg0, %c0_i32 : i32, i32
  }
}

</mosaic_0001>

<llo_original>
// kernel: _acc_2d_update.1
$region0: #{_acc_2d_update.1}
  #allocation0 [shape = 'u32[]', space=smem, size = 0x4, offset = 0x4, fixed_abs, tag = 'smem constant byte address 0x4 - core index']
  #allocation1 [shape = 'u32[144,128]{1,0:T(1,128)}', space=vmem, size = 0x12000, scoped, tag = 'internal scratch']
  %s0 = inlined_call_operand.vmem [shape: f32[8,32], index: 0, kind: input, shape index: {}]
  %s1 = inlined_call_operand.vmem [shape: s32[8,1], index: 1, kind: input, shape index: {}]
  %s2 = inlined_call_operand.hbm [shape: s32[1,1], index: 2, kind: output, shape index: {}]
  %s3 = sld [smem:[#allocation0]]
  $region18: #{_acc_2d_update.1} parent=0
    _
  %s5 = ssub.s32 1, %s3
  %s6 = scalar_select 0, %s5, %s3
  $region1: #{_acc_2d_update.1} parent=0
    #allocation2 [shape = 'u8[512]{0}', space=smem, size = 0x200, scoped, tag = 'output window, operand 0, single buffered']
    #allocation3 [shape = 's32[1]{0}', space=sflag, size = 0x4, scoped, tag = 'scoped memory for _acc_2d_update.1']
    %7 = vsyncpa [#allocation3], 0
    // Predicated region
    $region2: #{_acc_2d_update.1} parent=1 // pred_check
      _
    $region3: #{_acc_2d_update.1} parent=1 // pred_check_branch
      %9 = sbr.rel (0) target = $region5
    $region4: #{_acc_2d_update.1} parent=1 // pred_region
      _
    $region5: #{_acc_2d_update.1} parent=1 // pred_fallthru
      _
    // Predicated region
    $region6: #{_acc_2d_update.1} parent=1 // pred_check
      _
    $region7: #{_acc_2d_update.1} parent=1 // pred_check_branch
      %11 = sbr.rel (0) target = $region9
    $region8: #{_acc_2d_update.1} parent=1 // pred_region
      _
    $region9: #{_acc_2d_update.1} parent=1 // pred_fallthru
      _
    %v12 = vld [vmem:[%s0] sm:$0xff]
    %vm13 = vcmask 261120
    %v14 = vsel %vm13, %v12, -inf
    %15 = vmax.xlane.f32.xlu0 %v14
    %v16 = vpop.xlane.xlu0 %15
    %v17 = vlaneseq
    %v18 = vand.u32 %v17, 127
    %vm19 = vcmp.eq.f32.partialorder %v12, %v16
    %v20 = vsel %vm19, %v18, 32
    %v21 = vsel %vm13, %v20, 2147483647
    %v22 = vand.u32 %v21, 65535
    %v23 = vshra.s32 %v21, 16
    %v24 = vcvt.s32.f32 %v22
    %v25 = vcvt.s32.f32 %v23
    %26 = vmin.xlane.f32.xlu0 %v25
    %v27 = vpop.xlane.xlu0 %26
    %vm28 = vcmp.eq.f32.partialorder %v25, %v27
    %v29 = vsel %vm28, %v24, inf
    %30 = vmin.xlane.f32.xlu0 %v29
    %v31 = vpop.xlane.xlu0 %30
    %v32 = vcvt.f32.s32 %v31
    %v33 = vcvt.f32.s32 %v27
    %v34 = vshll.u32 %v33, 16
    %v35 = vadd.s32 %v34, %v32
    %v36 = vld [vmem:[%s1] sm:$0xff]
    %s37 = smul.u32 0, 8
    %v38 = vlaneseq
    %v39 = vshrl.u32 %v38, 7
    %v40 = vstv %s37
    %v41 = vadd.s32 %v40, %v39
    %vm42 = vcmp.lt.s32.totalorder %v41, 8
    %vm43 = vcmp.eq.s32.totalorder %v35, %v36
    %vm44 = vmand %vm42, %vm43
    %v45 = vsel %vm44, 1, 0
    %vm46 = vcmask 7168
    %v47 = vsel %vm46, %v45, 0
    %v48 = vand.u32 %v47, 65535
    %v49 = vshrl.u32 %v47, 16
    %v50 = vcvt.s32.f32 %v48
    %v51 = vcvt.s32.f32 %v49
    %52 = vadd.xlane.f32.xlu0 %v50
    %v53 = vpop.xlane.xlu0 %52
    %54 = vadd.xlane.f32.xlu0 %v51
    %v55 = vpop.xlane.xlu0 %54
    %v56 = vcvt.f32.s32 %v53
    %v57 = vcvt.f32.s32 %v55
    %v58 = vshll.u32 %v57, 16
    %v59 = vadd.s32 %v58, %v56
    %v60 = vrot.slane %v59, 4
    %v61 = vadd.s32 %v59, %v60
    %v62 = vrot.slane %v61, 2
    %v63 = vadd.s32 %v61, %v62
    %v64 = vrot.slane %v63, 1
    %v65 = vadd.s32 %v63, %v64
    %s66 = vtos %v65
    %s67 = scalar_lea.smem [#allocation2], 0
    %68 = sst [smem:[%s67]] %s66
    // Predicated region
    $region10: #{_acc_2d_update.1} parent=1 // pred_check
      _
    $region11: #{_acc_2d_update.1} parent=1 // pred_check_branch
      %70 = sbr.rel (0) target = $region13
    $region12: #{_acc_2d_update.1} parent=1 // pred_region
      %s72 = ssub.s32 16, 16
      %73 = vsyncadd [#allocation3], %s72
      %76 = dma.smem_to_hbm [#allocation2], 16, %s2, [#allocation3]
    $region13: #{_acc_2d_update.1} parent=1 // pred_fallthru
      _
    // Predicated region
    $region14: #{_acc_2d_update.1} parent=1 // pred_check
      _
    $region15: #{_acc_2d_update.1} parent=1 // pred_check_branch
      %78 = sbr.rel (0) target = $region17
    $region16: #{_acc_2d_update.1} parent=1 // pred_region
      %79 = dma.done [#allocation3], 16
    $region17: #{_acc_2d_update.1} parent=1 // pred_fallthru
      _
    %80 = sfence
    %81 = vsyncpa [#allocation3], 1

</llo_original>
